<compile_context>
chip_gen: v7x
topology: tpu7x:2x2x1
jax: 0.10.0
libtpu: 0.0.40
codegen_flags: <defaults>
</compile_context>

<pallas_src>
import jax
import jax.numpy as jnp
from jax.experimental import pallas as pl
from jax.experimental.pallas import tpu as pltpu


# ---------------------------------------------------------------------------
# Kernel 1: theta = softmax(W.T, axis=0), computed once per call.
# ---------------------------------------------------------------------------
def softmax_theta_kernel(w_ref, theta_ref):
    w = w_ref[...].astype(jnp.float32)                    # (K, K)
    m = jnp.max(w, axis=-1, keepdims=True)                # lane-axis reduce (XLU)
    e = jnp.exp(w - m)                                    # EUP
    s = e / jnp.sum(e, axis=-1, keepdims=True)            # softmax(W, axis=-1)
    # One-time XLU transpose (outside the hot matmul loop), cast once to the
    # matmul dtype so the steady-state loop has zero elementwise work.
    theta_ref[...] = s.T.astype(theta_ref.dtype)          # == softmax(W.T, axis=0)


# ---------------------------------------------------------------------------
# Kernel 2: out_tile = x_tile @ theta  (pure MXU, theta VMEM-resident).
# ---------------------------------------------------------------------------
def matmul_theta_kernel(x_ref, theta_ref, o_ref):
    o_ref[...] = jnp.dot(
        x_ref[...], theta_ref[...], preferred_element_type=jnp.float32
    ).astype(o_ref.dtype)


def noise_layer(x, w, *, tile_n: int = 512):
    """out = x @ softmax(W.T, axis=0); x: (N, K), w: (K, K) (nn.Linear layout)."""
    N, K = x.shape
    assert w.shape == (K, K)
    itemsize = jnp.dtype(x.dtype).itemsize

    # --- theta, computed once (hoisted softmax) ---------------------------
    theta = pl.pallas_call(
        softmax_theta_kernel,
        out_shape=jax.ShapeDtypeStruct((K, K), x.dtype),
        grid=(1,),
        in_specs=[pl.BlockSpec((K, K), lambda i: (0, 0))],
        out_specs=pl.BlockSpec((K, K), lambda i: (0, 0)),
        cost_estimate=pl.CostEstimate(
            flops=int(4 * K * K),
            transcendentals=int(K * K),
            bytes_accessed=int(K * K * (4 + itemsize)),
        ),
    )(w)

    # --- tiled matmul over N (pipelined, parallel across TCs on v7x) ------
    tile_n = min(tile_n, N)          # partial / full blocks handled by Pallas
    grid_n = pl.cdiv(N, tile_n)

    out = pl.pallas_call(
        matmul_theta_kernel,
        out_shape=jax.ShapeDtypeStruct((N, K), x.dtype),
        grid=(grid_n,),
        in_specs=[
            pl.BlockSpec((tile_n, K), lambda i: (i, 0)),   # x tile, pipelined
            pl.BlockSpec((K, K), lambda i: (0, 0)),        # theta, resident
        ],
        out_specs=pl.BlockSpec((tile_n, K), lambda i: (i, 0)),
        compiler_params=pltpu.CompilerParams(
            dimension_semantics=("parallel",),             # 2 TCs on v7x
        ),
        cost_estimate=pl.CostEstimate(
            flops=int(2 * N * K * K),
            transcendentals=0,
            bytes_accessed=int((2 * N * K + K * K) * itemsize),
        ),
    )(x, theta)
    return out


def noise_layer_ref(x, w):
    # Pure-JAX reference mirroring the PyTorch module exactly (f32 math).
    k = w.shape[0]
    eye = jnp.eye(k, dtype=jnp.float32)
    theta = eye @ w.astype(jnp.float32).T      # nn.Linear(eye) = eye @ W.T
    theta = jax.nn.softmax(theta, axis=0)      # Softmax(dim=0)
    return x.astype(jnp.float32) @ theta


if __name__ == "__main__":
    key = jax.random.PRNGKey(0)
    k_w, k_x = jax.random.split(key)

    # Small, tile-friendly shapes: module's `k` -> K=128, batch N=256.
    N, K = 256, 128
    w = jax.random.normal(k_w, (K, K), dtype=jnp.float32)   # theta weight (k, k)
    x = jax.random.normal(k_x, (N, K), dtype=jnp.float32)

    fwd = jax.jit(noise_layer)
    ref = noise_layer_ref(x, w)

    # f32 path: parity with the f32 PyTorch module.
    out = jax.block_until_ready(fwd(x, w))
    assert out.shape == (N, K)
    assert jnp.allclose(out, ref, atol=1e-5, rtol=1e-5), "f32 mismatch vs reference"

    # bf16 path: native bf16 MXU operands with f32 accumulation (production path).
    x_bf = x.astype(jnp.bfloat16)
    out_bf = jax.block_until_ready(fwd(x_bf, w))
    assert out_bf.dtype == jnp.bfloat16
    assert jnp.allclose(out_bf.astype(jnp.float32), ref, atol=5e-2, rtol=5e-2), \
        "bf16 mismatch vs reference"

    print("KERNEL_OK")
</pallas_src>

<mosaic_0001>
module attributes {stable_mosaic.version = 11 : i64} {
  func.func @softmax_theta_kernel(%arg0: i32, %arg1: memref<128x128xf32, #tpu.memory_space<vmem>>, %arg2: memref<128x128xf32, #tpu.memory_space<vmem>>) attributes {dimension_semantics = [#tpu.dimension_semantics<arbitrary>], iteration_bounds = array<i64: 1>, scalar_prefetch = 0 : i64, scratch_operands = 0 : i64, tpu.core_type = #tpu.core_type<tc>, window_params = [{pipeline_mode = #tpu.pipeline_mode<synchronous>, transform_indices = @transform_0, window_bounds = array<i64: 128, 128>}, {pipeline_mode = #tpu.pipeline_mode<synchronous>, transform_indices = @transform_1, window_bounds = array<i64: 128, 128>}]} {
    %c0 = arith.constant 0 : index
    %c0_0 = arith.constant 0 : index
    %0 = vector.load %arg1[%c0, %c0_0] : memref<128x128xf32, #tpu.memory_space<vmem>>, vector<128x128xf32>
    %cst = arith.constant dense<0xFF800000> : vector<128xf32>
    %1 = vector.multi_reduction <maximumf>, %0, %cst [1] : vector<128x128xf32> to vector<128xf32>
    %2 = vector.shape_cast %1 : vector<128xf32> to vector<128x1xf32>
    %3 = vector.broadcast %2 : vector<128x1xf32> to vector<128x128xf32>
    %4 = arith.subf %0, %3 : vector<128x128xf32>
    %5 = math.exp %4 : vector<128x128xf32>
    %cst_1 = arith.constant dense<0.000000e+00> : vector<128xf32>
    %6 = vector.multi_reduction <add>, %5, %cst_1 [1] : vector<128x128xf32> to vector<128xf32>
    %7 = vector.shape_cast %6 : vector<128xf32> to vector<128x1xf32>
    %8 = vector.broadcast %7 : vector<128x1xf32> to vector<128x128xf32>
    %9 = arith.divf %5, %8 : vector<128x128xf32>
    %10 = tpu.transpose %9, [1, 0] : vector<128x128xf32> -> vector<128x128xf32>
    %c0_2 = arith.constant 0 : index
    %c0_3 = arith.constant 0 : index
    %11 = vector.load %arg2[%c0_2, %c0_3] : memref<128x128xf32, #tpu.memory_space<vmem>>, vector<128x128xf32>
    tpu.vector_store %arg2[%c0_2, %c0_3], %10 {strides = array<i32>} : memref<128x128xf32, #tpu.memory_space<vmem>>, vector<128x128xf32>,
    return
  }
  func.func @transform_0(%arg0: i32) -> (i32, i32) {
    %c0_i32 = arith.constant 0 : i32
    %c0_i32_0 = arith.constant 0 : i32
    %c0_i32_1 = arith.constant 0 : i32
    return %c0_i32, %c0_i32_0 : i32, i32
  }
  func.func @transform_1(%arg0: i32) -> (i32, i32) {
    %c0_i32 = arith.constant 0 : i32
    %c0_i32_0 = arith.constant 0 : i32
    %c0_i32_1 = arith.constant 0 : i32
    return %c0_i32, %c0_i32_0 : i32, i32
  }
}

module attributes {stable_mosaic.version = 11 : i64} {
  func.func @matmul_theta_kernel(%arg0: i32, %arg1: memref<256x128xf32, #tpu.memory_space<vmem>>, %arg2: memref<128x128xf32, #tpu.memory_space<vmem>>, %arg3: memref<256x128xf32, #tpu.memory_space<vmem>>) attributes {dimension_semantics = [#tpu.dimension_semantics<parallel>], iteration_bounds = array<i64: 1>, scalar_prefetch = 0 : i64, scratch_operands = 0 : i64, tpu.core_type = #tpu.core_type<tc>, window_params = [{transform_indices = @transform_0, window_bounds = array<i64: 256, 128>}, {pipeline_mode = #tpu.pipeline_mode<synchronous>, transform_indices = @transform_1, window_bounds = array<i64: 128, 128>}, {transform_indices = @transform_2, window_bounds = array<i64: 256, 128>}]} {
    %c0 = arith.constant 0 : index
    %c0_0 = arith.constant 0 : index
    %0 = vector.load %arg1[%c0, %c0_0] : memref<256x128xf32, #tpu.memory_space<vmem>>, vector<256x128xf32>
    %c0_1 = arith.constant 0 : index
    %c0_2 = arith.constant 0 : index
    %1 = vector.load %arg2[%c0_1, %c0_2] : memref<128x128xf32, #tpu.memory_space<vmem>>, vector<128x128xf32>
    %cst = arith.constant dense<0.000000e+00> : vector<256x128xf32>
    %2 = tpu.matmul %0, %1, %cst {dimension_numbers = #tpu.dot_dimension_numbers<[1], [0], [0], [1], [0, 0, 1, 1], [], []>} : vector<256x128xf32>, vector<128x128xf32>, vector<256x128xf32> -> vector<256x128xf32>
    %c0_3 = arith.constant 0 : index
    %c0_4 = arith.constant 0 : index
    %3 = vector.load %arg3[%c0_3, %c0_4] : memref<256x128xf32, #tpu.memory_space<vmem>>, vector<256x128xf32>
    tpu.vector_store %arg3[%c0_3, %c0_4], %2 {strides = array<i32>} : memref<256x128xf32, #tpu.memory_space<vmem>>, vector<256x128xf32>,
    return
  }
  func.func @transform_0(%arg0: i32) -> (i32, i32) {
    %c0_i32 = arith.constant 0 : i32
    %c0_i32_0 = arith.constant 0 : i32
    return %arg0, %c0_i32 : i32, i32
  }
  func.func @transform_1(%arg0: i32) -> (i32, i32) {
    %c0_i32 = arith.constant 0 : i32
    %c0_i32_0 = arith.constant 0 : i32
    %c0_i32_1 = arith.constant 0 : i32
    return %c0_i32, %c0_i32_0 : i32, i32
  }
  func.func @transform_2(%arg0: i32) -> (i32, i32) {
    %c0_i32 = arith.constant 0 : i32
    %c0_i32_0 = arith.constant 0 : i32
    return %arg0, %c0_i32 : i32, i32
  }
}

</mosaic_0001>

<llo_original>
// kernel: noise_layer.3
$region0: #{noise_layer.3}
  #allocation0 [shape = 'u32[]', space=smem, size = 0x4, offset = 0x4, fixed_abs, tag = 'smem constant byte address 0x4 - core index']
  #allocation1 [shape = 'u32[144,128]{1,0:T(1,128)}', space=vmem, size = 0x12000, scoped, tag = 'internal scratch']
  %s0 = inlined_call_operand.vmem [shape: f32[256,128], index: 0, kind: input, shape index: {}]
  %s1 = inlined_call_operand.vmem [shape: f32[128,128], index: 1, kind: input, shape index: {}]
  %s2 = inlined_call_operand.hbm [shape: f32[256,128], index: 2, kind: output, shape index: {}]
  %s3 = sld [smem:[#allocation0]]
  $region18: #{noise_layer.3} parent=0
    _
  %s5 = ssub.s32 1, %s3
  %s6 = scalar_select 0, %s5, %s3
  $region1: #{noise_layer.3} parent=0
    #allocation2 [shape = 'u8[131072]{0}', space=vmem, size = 0x20000, scoped, tag = 'output window, operand 0, single buffered']
    #allocation3 [shape = 's32[1]{0}', space=sflag, size = 0x4, scoped, tag = 'scoped memory for noise_layer.3']
    %7 = vsyncpa [#allocation3], 0
    // Predicated region
    $region2: #{noise_layer.3} parent=1 // pred_check
      _
    $region3: #{noise_layer.3} parent=1 // pred_check_branch
      %9 = sbr.rel (0) target = $region5
    $region4: #{noise_layer.3} parent=1 // pred_region
      _
    $region5: #{noise_layer.3} parent=1 // pred_fallthru
      _
    // Predicated region
    $region6: #{noise_layer.3} parent=1 // pred_check
      _
    $region7: #{noise_layer.3} parent=1 // pred_check_branch
      %11 = sbr.rel (0) target = $region9
    $region8: #{noise_layer.3} parent=1 // pred_region
      _
    $region9: #{noise_layer.3} parent=1 // pred_fallthru
      _
    %v12 = vld [vmem:[%s0] sm:$0xff]
    %v13 = vld [vmem:[%s0 + $0x8] sm:$0xff]
    %v14 = vld [vmem:[%s0 + $0x10] sm:$0xff]
    %v15 = vld [vmem:[%s0 + $0x18] sm:$0xff]
    %v16 = vld [vmem:[%s0 + $0x20] sm:$0xff]
    %v17 = vld [vmem:[%s0 + $0x28] sm:$0xff]
    %v18 = vld [vmem:[%s0 + $0x30] sm:$0xff]
    %v19 = vld [vmem:[%s0 + $0x38] sm:$0xff]
    %v20 = vld [vmem:[%s0 + $0x40] sm:$0xff]
    %v21 = vld [vmem:[%s0 + $0x48] sm:$0xff]
    %v22 = vld [vmem:[%s0 + $0x50] sm:$0xff]
    %v23 = vld [vmem:[%s0 + $0x58] sm:$0xff]
    %v24 = vld [vmem:[%s0 + $0x60] sm:$0xff]
    %v25 = vld [vmem:[%s0 + $0x68] sm:$0xff]
    %v26 = vld [vmem:[%s0 + $0x70] sm:$0xff]
    %v27 = vld [vmem:[%s0 + $0x78] sm:$0xff]
    %v28 = vld [vmem:[%s0 + $0x80] sm:$0xff]
    %v29 = vld [vmem:[%s0 + $0x88] sm:$0xff]
    %v30 = vld [vmem:[%s0 + $0x90] sm:$0xff]
    %v31 = vld [vmem:[%s0 + $0x98] sm:$0xff]
    %v32 = vld [vmem:[%s0 + $0xa0] sm:$0xff]
    %v33 = vld [vmem:[%s0 + $0xa8] sm:$0xff]
    %v34 = vld [vmem:[%s0 + $0xb0] sm:$0xff]
    %v35 = vld [vmem:[%s0 + $0xb8] sm:$0xff]
    %v36 = vld [vmem:[%s0 + $0xc0] sm:$0xff]
    %v37 = vld [vmem:[%s0 + $0xc8] sm:$0xff]
    %v38 = vld [vmem:[%s0 + $0xd0] sm:$0xff]
    %v39 = vld [vmem:[%s0 + $0xd8] sm:$0xff]
    %v40 = vld [vmem:[%s0 + $0xe0] sm:$0xff]
    %v41 = vld [vmem:[%s0 + $0xe8] sm:$0xff]
    %v42 = vld [vmem:[%s0 + $0xf0] sm:$0xff]
    %v43 = vld [vmem:[%s0 + $0xf8] sm:$0xff]
    %v44 = vld [vmem:[%s1] sm:$0xff]
    %v45 = vld [vmem:[%s1 + $0x8] sm:$0xff]
    %v46 = vld [vmem:[%s1 + $0x10] sm:$0xff]
    %v47 = vld [vmem:[%s1 + $0x18] sm:$0xff]
    %v48 = vld [vmem:[%s1 + $0x20] sm:$0xff]
    %v49 = vld [vmem:[%s1 + $0x28] sm:$0xff]
    %v50 = vld [vmem:[%s1 + $0x30] sm:$0xff]
    %v51 = vld [vmem:[%s1 + $0x38] sm:$0xff]
    %v52 = vld [vmem:[%s1 + $0x40] sm:$0xff]
    %v53 = vld [vmem:[%s1 + $0x48] sm:$0xff]
    %v54 = vld [vmem:[%s1 + $0x50] sm:$0xff]
    %v55 = vld [vmem:[%s1 + $0x58] sm:$0xff]
    %v56 = vld [vmem:[%s1 + $0x60] sm:$0xff]
    %v57 = vld [vmem:[%s1 + $0x68] sm:$0xff]
    %v58 = vld [vmem:[%s1 + $0x70] sm:$0xff]
    %v59 = vld [vmem:[%s1 + $0x78] sm:$0xff]
    %60 = vmatprep.subr.mxu0 0.0
    %61 = vmatpush1.msra.mxu0 %v44
    %62 = vmatprep.subr.mxu0 0.0
    %63 = vmatpush1.msra.mxu0 %v45
    %64 = vmatprep.subr.mxu0 0.0
    %65 = vmatpush1.msra.mxu0 %v46
    %66 = vmatprep.subr.mxu0 0.0
    %67 = vmatpush1.msra.mxu0 %v47
    %68 = vmatprep.subr.mxu0 0.0
    %69 = vmatpush1.msra.mxu0 %v48
    %70 = vmatprep.subr.mxu0 0.0
    %71 = vmatpush1.msra.mxu0 %v49
    %72 = vmatprep.subr.mxu0 0.0
    %73 = vmatpush1.msra.mxu0 %v50
    %74 = vmatprep.subr.mxu0 0.0
    %75 = vmatpush1.msra.mxu0 %v51
    %76 = vmatprep.subr.mxu0 0.0
    %77 = vmatpush1.msra.mxu0 %v52
    %78 = vmatprep.subr.mxu0 0.0
    %79 = vmatpush1.msra.mxu0 %v53
    %80 = vmatprep.subr.mxu0 0.0
    %81 = vmatpush1.msra.mxu0 %v54
    %82 = vmatprep.subr.mxu0 0.0
    %83 = vmatpush1.msra.mxu0 %v55
    %84 = vmatprep.subr.mxu0 0.0
    %85 = vmatpush1.msra.mxu0 %v56
    %86 = vmatprep.subr.mxu0 0.0
    %87 = vmatpush1.msra.mxu0 %v57
    %88 = vmatprep.subr.mxu0 0.0
    %89 = vmatpush1.msra.mxu0 %v58
    %90 = vmatprep.subr.mxu0 0.0
    %91 = vmatpush1.msra.mxu0 %v59
    %92 = vmatprep.subr.mxu0 0.0
    %93 = vmatpush1.msra.mxu0 0.0
    %94 = vmatprep.subr.mxu0 0.0
    %95 = vmatpush1.msra.mxu0 0.0
    %96 = vmatprep.subr.mxu0 0.0
    %97 = vmatpush1.msra.mxu0 0.0
    %98 = vmatprep.subr.mxu0 0.0
    %99 = vmatpush1.msra.mxu0 0.0
    %100 = vmatprep.subr.mxu0 0.0
    %101 = vmatpush1.msra.mxu0 0.0
    %102 = vmatprep.subr.mxu0 0.0
    %103 = vmatpush1.msra.mxu0 0.0
    %104 = vmatprep.subr.mxu0 0.0
    %105 = vmatpush1.msra.mxu0 0.0
    %106 = vmatprep.subr.mxu0 0.0
    %107 = vmatpush1.msra.mxu0 0.0
    %108 = vmatprep.subr.mxu0 0.0
    %109 = vmatpush1.msra.mxu0 0.0
    %110 = vmatprep.subr.mxu0 0.0
    %111 = vmatpush1.msra.mxu0 0.0
    %112 = vmatprep.subr.mxu0 0.0
    %113 = vmatpush1.msra.mxu0 0.0
    %114 = vmatprep.subr.mxu0 0.0
    %115 = vmatpush1.msra.mxu0 0.0
    %116 = vmatprep.subr.mxu0 0.0
    %117 = vmatpush1.msra.mxu0 0.0
    %118 = vmatprep.subr.mxu0 0.0
    %119 = vmatpush1.msra.mxu0 0.0
    %120 = vmatprep.subr.mxu0 0.0
    %121 = vmatpush1.msra.mxu0 0.0
    %122 = vmatprep.subr.mxu0 0.0
    %123 = vmatpush1.msra.mxu0 0.0
    %124 = vmatprep.mubr.f32.mxu0 0.0
    %125 = vmatmul.mubr.f32.gmra.mrb[0].mxu0 %v12
    %v126 = vpop.f32.mrb[0].mxu0
    %v127 = vadd.f32 0.0, %v126
    %v128 = vpop.f32.mrb[0].mxu0
    %129 = vmatprep.mubr.f32.mxu0 0.0
    %130 = vmatmul.mubr.f32.gmra.mrb[0].mxu0 %v13
    %v131 = vpop.f32.mrb[0].mxu0
    %v132 = vadd.f32 0.0, %v131
    %v133 = vpop.f32.mrb[0].mxu0
    %134 = vmatprep.mubr.f32.mxu0 0.0
    %135 = vmatmul.mubr.f32.gmra.mrb[0].mxu0 %v14
    %v136 = vpop.f32.mrb[0].mxu0
    %v137 = vadd.f32 0.0, %v136
    %v138 = vpop.f32.mrb[0].mxu0
    %139 = vmatprep.mubr.f32.mxu0 0.0
    %140 = vmatmul.mubr.f32.gmra.mrb[0].mxu0 %v15
    %v141 = vpop.f32.mrb[0].mxu0
    %v142 = vadd.f32 0.0, %v141
    %v143 = vpop.f32.mrb[0].mxu0
    %144 = vmatprep.mubr.f32.mxu0 0.0
    %145 = vmatmul.mubr.f32.gmra.mrb[0].mxu0 %v16
    %v146 = vpop.f32.mrb[0].mxu0
    %v147 = vadd.f32 0.0, %v146
    %v148 = vpop.f32.mrb[0].mxu0
    %149 = vmatprep.mubr.f32.mxu0 0.0
    %150 = vmatmul.mubr.f32.gmra.mrb[0].mxu0 %v17
    %v151 = vpop.f32.mrb[0].mxu0
    %v152 = vadd.f32 0.0, %v151
    %v153 = vpop.f32.mrb[0].mxu0
    %154 = vmatprep.mubr.f32.mxu0 0.0
    %155 = vmatmul.mubr.f32.gmra.mrb[0].mxu0 %v18
    %v156 = vpop.f32.mrb[0].mxu0
    %v157 = vadd.f32 0.0, %v156
    %v158 = vpop.f32.mrb[0].mxu0
    %159 = vmatprep.mubr.f32.mxu0 0.0
    %160 = vmatmul.mubr.f32.gmra.mrb[0].mxu0 %v19
    %v161 = vpop.f32.mrb[0].mxu0
    %v162 = vadd.f32 0.0, %v161
    %v163 = vpop.f32.mrb[0].mxu0
    %164 = vmatprep.mubr.f32.mxu0 0.0
    %165 = vmatmul.mubr.f32.gmra.mrb[0].mxu0 %v20
    %v166 = vpop.f32.mrb[0].mxu0
    %v167 = vadd.f32 0.0, %v166
    %v168 = vpop.f32.mrb[0].mxu0
    %169 = vmatprep.mubr.f32.mxu0 0.0
    %170 = vmatmul.mubr.f32.gmra.mrb[0].mxu0 %v21
    %v171 = vpop.f32.mrb[0].mxu0
    %v172 = vadd.f32 0.0, %v171
    %v173 = vpop.f32.mrb[0].mxu0
    %174 = vmatprep.mubr.f32.mxu0 0.0
    %175 = vmatmul.mubr.f32.gmra.mrb[0].mxu0 %v22
    %v176 = vpop.f32.mrb[0].mxu0
    %v177 = vadd.f32 0.0, %v176
    %v178 = vpop.f32.mrb[0].mxu0
    %179 = vmatprep.mubr.f32.mxu0 0.0
    %180 = vmatmul.mubr.f32.gmra.mrb[0].mxu0 %v23
    %v181 = vpop.f32.mrb[0].mxu0
    %v182 = vadd.f32 0.0, %v181
    %v183 = vpop.f32.mrb[0].mxu0
    %184 = vmatprep.mubr.f32.mxu0 0.0
    %185 = vmatmul.mubr.f32.gmra.mrb[0].mxu0 %v24
    %v186 = vpop.f32.mrb[0].mxu0
    %v187 = vadd.f32 0.0, %v186
    %v188 = vpop.f32.mrb[0].mxu0
    %189 = vmatprep.mubr.f32.mxu0 0.0
    %190 = vmatmul.mubr.f32.gmra.mrb[0].mxu0 %v25
    %v191 = vpop.f32.mrb[0].mxu0
    %v192 = vadd.f32 0.0, %v191
    %v193 = vpop.f32.mrb[0].mxu0
    %194 = vmatprep.mubr.f32.mxu0 0.0
    %195 = vmatmul.mubr.f32.gmra.mrb[0].mxu0 %v26
    %v196 = vpop.f32.mrb[0].mxu0
    %v197 = vadd.f32 0.0, %v196
    %v198 = vpop.f32.mrb[0].mxu0
    %199 = vmatprep.mubr.f32.mxu0 0.0
    %200 = vmatmul.mubr.f32.gmra.mrb[0].mxu0 %v27
    %v201 = vpop.f32.mrb[0].mxu0
    %v202 = vadd.f32 0.0, %v201
    %v203 = vpop.f32.mrb[0].mxu0
    %204 = vmatprep.mubr.f32.mxu0 0.0
    %205 = vmatmul.mubr.f32.gmra.mrb[0].mxu0 %v28
    %v206 = vpop.f32.mrb[0].mxu0
    %v207 = vadd.f32 0.0, %v206
    %v208 = vpop.f32.mrb[0].mxu0
    %209 = vmatprep.mubr.f32.mxu0 0.0
    %210 = vmatmul.mubr.f32.gmra.mrb[0].mxu0 %v29
    %v211 = vpop.f32.mrb[0].mxu0
    %v212 = vadd.f32 0.0, %v211
    %v213 = vpop.f32.mrb[0].mxu0
    %214 = vmatprep.mubr.f32.mxu0 0.0
    %215 = vmatmul.mubr.f32.gmra.mrb[0].mxu0 %v30
    %v216 = vpop.f32.mrb[0].mxu0
    %v217 = vadd.f32 0.0, %v216
    %v218 = vpop.f32.mrb[0].mxu0
    %219 = vmatprep.mubr.f32.mxu0 0.0
    %220 = vmatmul.mubr.f32.gmra.mrb[0].mxu0 %v31
    %v221 = vpop.f32.mrb[0].mxu0
    %v222 = vadd.f32 0.0, %v221
    %v223 = vpop.f32.mrb[0].mxu0
    %224 = vmatprep.mubr.f32.mxu0 0.0
    %225 = vmatmul.mubr.f32.gmra.mrb[0].mxu0 %v32
    %v226 = vpop.f32.mrb[0].mxu0
    %v227 = vadd.f32 0.0, %v226
    %v228 = vpop.f32.mrb[0].mxu0
    %229 = vmatprep.mubr.f32.mxu0 0.0
    %230 = vmatmul.mubr.f32.gmra.mrb[0].mxu0 %v33
    %v231 = vpop.f32.mrb[0].mxu0
    %v232 = vadd.f32 0.0, %v231
    %v233 = vpop.f32.mrb[0].mxu0
    %234 = vmatprep.mubr.f32.mxu0 0.0
    %235 = vmatmul.mubr.f32.gmra.mrb[0].mxu0 %v34
    %v236 = vpop.f32.mrb[0].mxu0
    %v237 = vadd.f32 0.0, %v236
    %v238 = vpop.f32.mrb[0].mxu0
    %239 = vmatprep.mubr.f32.mxu0 0.0
    %240 = vmatmul.mubr.f32.gmra.mrb[0].mxu0 %v35
    %v241 = vpop.f32.mrb[0].mxu0
    %v242 = vadd.f32 0.0, %v241
    %v243 = vpop.f32.mrb[0].mxu0
    %244 = vmatprep.mubr.f32.mxu0 0.0
    %245 = vmatmul.mubr.f32.gmra.mrb[0].mxu0 %v36
    %v246 = vpop.f32.mrb[0].mxu0
    %v247 = vadd.f32 0.0, %v246
    %v248 = vpop.f32.mrb[0].mxu0
    %249 = vmatprep.mubr.f32.mxu0 0.0
    %250 = vmatmul.mubr.f32.gmra.mrb[0].mxu0 %v37
    %v251 = vpop.f32.mrb[0].mxu0
    %v252 = vadd.f32 0.0, %v251
    %v253 = vpop.f32.mrb[0].mxu0
    %254 = vmatprep.mubr.f32.mxu0 0.0
    %255 = vmatmul.mubr.f32.gmra.mrb[0].mxu0 %v38
    %v256 = vpop.f32.mrb[0].mxu0
    %v257 = vadd.f32 0.0, %v256
    %v258 = vpop.f32.mrb[0].mxu0
    %259 = vmatprep.mubr.f32.mxu0 0.0
    %260 = vmatmul.mubr.f32.gmra.mrb[0].mxu0 %v39
    %v261 = vpop.f32.mrb[0].mxu0
    %v262 = vadd.f32 0.0, %v261
    %v263 = vpop.f32.mrb[0].mxu0
    %264 = vmatprep.mubr.f32.mxu0 0.0
    %265 = vmatmul.mubr.f32.gmra.mrb[0].mxu0 %v40
    %v266 = vpop.f32.mrb[0].mxu0
    %v267 = vadd.f32 0.0, %v266
    %v268 = vpop.f32.mrb[0].mxu0
    %269 = vmatprep.mubr.f32.mxu0 0.0
    %270 = vmatmul.mubr.f32.gmra.mrb[0].mxu0 %v41
    %v271 = vpop.f32.mrb[0].mxu0
    %v272 = vadd.f32 0.0, %v271
    %v273 = vpop.f32.mrb[0].mxu0
    %274 = vmatprep.mubr.f32.mxu0 0.0
    %275 = vmatmul.mubr.f32.gmra.mrb[0].mxu0 %v42
    %v276 = vpop.f32.mrb[0].mxu0
    %v277 = vadd.f32 0.0, %v276
    %v278 = vpop.f32.mrb[0].mxu0
    %279 = vmatprep.mubr.f32.mxu0 0.0
    %280 = vmatmul.mubr.f32.gmra.mrb[0].mxu0 %v43
    %v281 = vpop.f32.mrb[0].mxu0
    %v282 = vadd.f32 0.0, %v281
    %v283 = vpop.f32.mrb[0].mxu0
    %284 = vdwg.mxu0
    %285 = vst [vmem:[#allocation2] sm:$0xff] %v127
    %286 = vst [vmem:[#allocation2 + $0x8] sm:$0xff] %v132
    %287 = vst [vmem:[#allocation2 + $0x10] sm:$0xff] %v137
    %288 = vst [vmem:[#allocation2 + $0x18] sm:$0xff] %v142
    %289 = vst [vmem:[#allocation2 + $0x20] sm:$0xff] %v147
    %290 = vst [vmem:[#allocation2 + $0x28] sm:$0xff] %v152
    %291 = vst [vmem:[#allocation2 + $0x30] sm:$0xff] %v157
    %292 = vst [vmem:[#allocation2 + $0x38] sm:$0xff] %v162
    %293 = vst [vmem:[#allocation2 + $0x40] sm:$0xff] %v167
    %294 = vst [vmem:[#allocation2 + $0x48] sm:$0xff] %v172
    %295 = vst [vmem:[#allocation2 + $0x50] sm:$0xff] %v177
    %296 = vst [vmem:[#allocation2 + $0x58] sm:$0xff] %v182
    %297 = vst [vmem:[#allocation2 + $0x60] sm:$0xff] %v187
    %298 = vst [vmem:[#allocation2 + $0x68] sm:$0xff] %v192
    %299 = vst [vmem:[#allocation2 + $0x70] sm:$0xff] %v197
    %300 = vst [vmem:[#allocation2 + $0x78] sm:$0xff] %v202
    %301 = vst [vmem:[#allocation2 + $0x80] sm:$0xff] %v207
    %302 = vst [vmem:[#allocation2 + $0x88] sm:$0xff] %v212
    %303 = vst [vmem:[#allocation2 + $0x90] sm:$0xff] %v217
    %304 = vst [vmem:[#allocation2 + $0x98] sm:$0xff] %v222
    %305 = vst [vmem:[#allocation2 + $0xa0] sm:$0xff] %v227
    %306 = vst [vmem:[#allocation2 + $0xa8] sm:$0xff] %v232
    %307 = vst [vmem:[#allocation2 + $0xb0] sm:$0xff] %v237
    %308 = vst [vmem:[#allocation2 + $0xb8] sm:$0xff] %v242
    %309 = vst [vmem:[#allocation2 + $0xc0] sm:$0xff] %v247
    %310 = vst [vmem:[#allocation2 + $0xc8] sm:$0xff] %v252
    %311 = vst [vmem:[#allocation2 + $0xd0] sm:$0xff] %v257
    %312 = vst [vmem:[#allocation2 + $0xd8] sm:$0xff] %v262
    %313 = vst [vmem:[#allocation2 + $0xe0] sm:$0xff] %v267
    %314 = vst [vmem:[#allocation2 + $0xe8] sm:$0xff] %v272
    %315 = vst [vmem:[#allocation2 + $0xf0] sm:$0xff] %v277
    %316 = vst [vmem:[#allocation2 + $0xf8] sm:$0xff] %v282
    // Predicated region
    $region10: #{noise_layer.3} parent=1 // pred_check
      _
    $region11: #{noise_layer.3} parent=1 // pred_check_branch
      %318 = sbr.rel (0) target = $region13
    $region12: #{noise_layer.3} parent=1 // pred_region
      %s320 = ssub.s32 4096, 4096
      %321 = vsyncadd [#allocation3], %s320
      %s322 = sshll.u32 [#allocation2], 4
      %s323 = int_to_ptr.vmem [resolvable:$true] %s322
      %328 = dma.vmem_to_hbm [thread:$0]  %s323, 4096, %s2, [#allocation3], 128, 128, 8
    $region13: #{noise_layer.3} parent=1 // pred_fallthru
      _
    // Predicated region
    $region14: #{noise_layer.3} parent=1 // pred_check
      _
    $region15: #{noise_layer.3} parent=1 // pred_check_branch
      %330 = sbr.rel (0) target = $region17
    $region16: #{noise_layer.3} parent=1 // pred_region
      %331 = dma.done [#allocation3], 4096
    $region17: #{noise_layer.3} parent=1 // pred_fallthru
      _
    %332 = vsyncpa [#allocation3], 1

// kernel: noise_layer.2
$region0: #{noise_layer.2}
  #allocation0 [shape = 'u32[]', space=smem, size = 0x4, offset = 0x4, fixed_abs, tag = 'smem constant byte address 0x4 - core index']
  #allocation1 [shape = 'u32[144,128]{1,0:T(1,128)}', space=vmem, size = 0x12000, scoped, tag = 'internal scratch']
  %s0 = inlined_call_operand.hbm [shape: f32[128,128], index: 0, kind: input, shape index: {}]
  %s1 = inlined_call_operand.vmem [shape: f32[128,128], index: 1, kind: output, shape index: {}]
  %s2 = sld [smem:[#allocation0]]
  $region18: #{noise_layer.2} parent=0
    _
  %s4 = ssub.s32 1, %s2
  %s5 = scalar_select 0, %s4, %s2
  $region1: #{noise_layer.2} parent=0
    #allocation2 [shape = 'u8[65536]{0}', space=vmem, size = 0x10000, scoped, tag = 'input window, operand 0, single buffered']
    #allocation3 [shape = 's32[1]{0}', space=sflag, size = 0x4, scoped, tag = 'scoped memory for noise_layer.2']
    %6 = vsyncpa [#allocation3], 0
    // Predicated region
    $region2: #{noise_layer.2} parent=1 // pred_check
      _
    $region3: #{noise_layer.2} parent=1 // pred_check_branch
      %8 = sbr.rel (0) target = $region5
    $region4: #{noise_layer.2} parent=1 // pred_region
      %s10 = ssub.s32 2048, 2048
      %11 = vsyncadd [#allocation3], %s10
      %s12 = sshll.u32 [#allocation2], 4
      %s13 = int_to_ptr.vmem [resolvable:$true] %s12
      %18 = dma.hbm_to_vmem [thread:$0]  %s0, 2048, %s13, [#allocation3], 128, 128, 8
    $region5: #{noise_layer.2} parent=1 // pred_fallthru
      _
    // Predicated region
    $region6: #{noise_layer.2} parent=1 // pred_check
      _
    $region7: #{noise_layer.2} parent=1 // pred_check_branch
      %20 = sbr.rel (0) target = $region9
    $region8: #{noise_layer.2} parent=1 // pred_region
      %21 = dma.done [#allocation3], 2048
    $region9: #{noise_layer.2} parent=1 // pred_fallthru
      _
    %v22 = vld [vmem:[#allocation2] sm:$0xff]
    %v23 = vld [vmem:[#allocation2 + $0x8] sm:$0xff]
    %v24 = vld [vmem:[#allocation2 + $0x10] sm:$0xff]
    %v25 = vld [vmem:[#allocation2 + $0x18] sm:$0xff]
    %v26 = vld [vmem:[#allocation2 + $0x20] sm:$0xff]
    %v27 = vld [vmem:[#allocation2 + $0x28] sm:$0xff]
    %v28 = vld [vmem:[#allocation2 + $0x30] sm:$0xff]
    %v29 = vld [vmem:[#allocation2 + $0x38] sm:$0xff]
    %v30 = vld [vmem:[#allocation2 + $0x40] sm:$0xff]
    %v31 = vld [vmem:[#allocation2 + $0x48] sm:$0xff]
    %v32 = vld [vmem:[#allocation2 + $0x50] sm:$0xff]
    %v33 = vld [vmem:[#allocation2 + $0x58] sm:$0xff]
    %v34 = vld [vmem:[#allocation2 + $0x60] sm:$0xff]
    %v35 = vld [vmem:[#allocation2 + $0x68] sm:$0xff]
    %v36 = vld [vmem:[#allocation2 + $0x70] sm:$0xff]
    %v37 = vld [vmem:[#allocation2 + $0x78] sm:$0xff]
    %38 = vmax.xlane.f32.xlu0 %v22
    %v39 = vpop.xlane.xlu0 %38
    %40 = vmax.xlane.f32.xlu0 %v23
    %v41 = vpop.xlane.xlu0 %40
    %42 = vmax.xlane.f32.xlu0 %v24
    %v43 = vpop.xlane.xlu0 %42
    %44 = vmax.xlane.f32.xlu0 %v25
    %v45 = vpop.xlane.xlu0 %44
    %46 = vmax.xlane.f32.xlu0 %v26
    %v47 = vpop.xlane.xlu0 %46
    %48 = vmax.xlane.f32.xlu0 %v27
    %v49 = vpop.xlane.xlu0 %48
    %50 = vmax.xlane.f32.xlu0 %v28
    %v51 = vpop.xlane.xlu0 %50
    %52 = vmax.xlane.f32.xlu0 %v29
    %v53 = vpop.xlane.xlu0 %52
    %54 = vmax.xlane.f32.xlu0 %v30
    %v55 = vpop.xlane.xlu0 %54
    %56 = vmax.xlane.f32.xlu0 %v31
    %v57 = vpop.xlane.xlu0 %56
    %58 = vmax.xlane.f32.xlu0 %v32
    %v59 = vpop.xlane.xlu0 %58
    %60 = vmax.xlane.f32.xlu0 %v33
    %v61 = vpop.xlane.xlu0 %60
    %62 = vmax.xlane.f32.xlu0 %v34
    %v63 = vpop.xlane.xlu0 %62
    %64 = vmax.xlane.f32.xlu0 %v35
    %v65 = vpop.xlane.xlu0 %64
    %66 = vmax.xlane.f32.xlu0 %v36
    %v67 = vpop.xlane.xlu0 %66
    %68 = vmax.xlane.f32.xlu0 %v37
    %v69 = vpop.xlane.xlu0 %68
    %v70 = vsub.f32 %v22, %v39
    %v71 = vsub.f32 %v23, %v41
    %v72 = vsub.f32 %v24, %v43
    %v73 = vsub.f32 %v25, %v45
    %v74 = vsub.f32 %v26, %v47
    %v75 = vsub.f32 %v27, %v49
    %v76 = vsub.f32 %v28, %v51
    %v77 = vsub.f32 %v29, %v53
    %v78 = vsub.f32 %v30, %v55
    %v79 = vsub.f32 %v31, %v57
    %v80 = vsub.f32 %v32, %v59
    %v81 = vsub.f32 %v33, %v61
    %v82 = vsub.f32 %v34, %v63
    %v83 = vsub.f32 %v35, %v65
    %v84 = vsub.f32 %v36, %v67
    %v85 = vsub.f32 %v37, %v69
    %v86 = vmul.f32 %v70, 1.442695
    %v87 = vpow.pop %v86
    %v88 = vmul.f32 %v71, 1.442695
    %v89 = vpow.pop %v88
    %v90 = vmul.f32 %v72, 1.442695
    %v91 = vpow.pop %v90
    %v92 = vmul.f32 %v73, 1.442695
    %v93 = vpow.pop %v92
    %v94 = vmul.f32 %v74, 1.442695
    %v95 = vpow.pop %v94
    %v96 = vmul.f32 %v75, 1.442695
    %v97 = vpow.pop %v96
    %v98 = vmul.f32 %v76, 1.442695
    %v99 = vpow.pop %v98
    %v100 = vmul.f32 %v77, 1.442695
    %v101 = vpow.pop %v100
    %v102 = vmul.f32 %v78, 1.442695
    %v103 = vpow.pop %v102
    %v104 = vmul.f32 %v79, 1.442695
    %v105 = vpow.pop %v104
    %v106 = vmul.f32 %v80, 1.442695
    %v107 = vpow.pop %v106
    %v108 = vmul.f32 %v81, 1.442695
    %v109 = vpow.pop %v108
    %v110 = vmul.f32 %v82, 1.442695
    %v111 = vpow.pop %v110
    %v112 = vmul.f32 %v83, 1.442695
    %v113 = vpow.pop %v112
    %v114 = vmul.f32 %v84, 1.442695
    %v115 = vpow.pop %v114
    %v116 = vmul.f32 %v85, 1.442695
    %v117 = vpow.pop %v116
    %118 = vadd.xlane.f32.xlu0 %v87
    %v119 = vpop.xlane.xlu0 %118
    %120 = vadd.xlane.f32.xlu0 %v89
    %v121 = vpop.xlane.xlu0 %120
    %122 = vadd.xlane.f32.xlu0 %v91
    %v123 = vpop.xlane.xlu0 %122
    %124 = vadd.xlane.f32.xlu0 %v93
    %v125 = vpop.xlane.xlu0 %124
    %126 = vadd.xlane.f32.xlu0 %v95
    %v127 = vpop.xlane.xlu0 %126
    %128 = vadd.xlane.f32.xlu0 %v97
    %v129 = vpop.xlane.xlu0 %128
    %130 = vadd.xlane.f32.xlu0 %v99
    %v131 = vpop.xlane.xlu0 %130
    %132 = vadd.xlane.f32.xlu0 %v101
    %v133 = vpop.xlane.xlu0 %132
    %134 = vadd.xlane.f32.xlu0 %v103
    %v135 = vpop.xlane.xlu0 %134
    %136 = vadd.xlane.f32.xlu0 %v105
    %v137 = vpop.xlane.xlu0 %136
    %138 = vadd.xlane.f32.xlu0 %v107
    %v139 = vpop.xlane.xlu0 %138
    %140 = vadd.xlane.f32.xlu0 %v109
    %v141 = vpop.xlane.xlu0 %140
    %142 = vadd.xlane.f32.xlu0 %v111
    %v143 = vpop.xlane.xlu0 %142
    %144 = vadd.xlane.f32.xlu0 %v113
    %v145 = vpop.xlane.xlu0 %144
    %146 = vadd.xlane.f32.xlu0 %v115
    %v147 = vpop.xlane.xlu0 %146
    %148 = vadd.xlane.f32.xlu0 %v117
    %v149 = vpop.xlane.xlu0 %148
    %v150 = vrcp.pop %v119
    %v151 = vmul.f32 %v87, %v150
    %v152 = vrcp.pop %v121
    %v153 = vmul.f32 %v89, %v152
    %v154 = vrcp.pop %v123
    %v155 = vmul.f32 %v91, %v154
    %v156 = vrcp.pop %v125
    %v157 = vmul.f32 %v93, %v156
    %v158 = vrcp.pop %v127
    %v159 = vmul.f32 %v95, %v158
    %v160 = vrcp.pop %v129
    %v161 = vmul.f32 %v97, %v160
    %v162 = vrcp.pop %v131
    %v163 = vmul.f32 %v99, %v162
    %v164 = vrcp.pop %v133
    %v165 = vmul.f32 %v101, %v164
    %v166 = vrcp.pop %v135
    %v167 = vmul.f32 %v103, %v166
    %v168 = vrcp.pop %v137
    %v169 = vmul.f32 %v105, %v168
    %v170 = vrcp.pop %v139
    %v171 = vmul.f32 %v107, %v170
    %v172 = vrcp.pop %v141
    %v173 = vmul.f32 %v109, %v172
    %v174 = vrcp.pop %v143
    %v175 = vmul.f32 %v111, %v174
    %v176 = vrcp.pop %v145
    %v177 = vmul.f32 %v113, %v176
    %v178 = vrcp.pop %v147
    %v179 = vmul.f32 %v115, %v178
    %v180 = vrcp.pop %v149
    %v181 = vmul.f32 %v117, %v180
    %182 = vxpose.xlu0.b32.start [1/16] %v151, 128
    %183 = vxpose.xlu0.b32.cont [2/16] %v153, 128
    %184 = vxpose.xlu0.b32.cont [3/16] %v155, 128
    %185 = vxpose.xlu0.b32.cont [4/16] %v157, 128
    %186 = vxpose.xlu0.b32.cont [5/16] %v159, 128
    %187 = vxpose.xlu0.b32.cont [6/16] %v161, 128
    %188 = vxpose.xlu0.b32.cont [7/16] %v163, 128
    %189 = vxpose.xlu0.b32.cont [8/16] %v165, 128
    %190 = vxpose.xlu0.b32.cont [9/16] %v167, 128
    %191 = vxpose.xlu0.b32.cont [10/16] %v169, 128
    %192 = vxpose.xlu0.b32.cont [11/16] %v171, 128
    %193 = vxpose.xlu0.b32.cont [12/16] %v173, 128
    %194 = vxpose.xlu0.b32.cont [13/16] %v175, 128
    %195 = vxpose.xlu0.b32.cont [14/16] %v177, 128
    %196 = vxpose.xlu0.b32.cont [15/16] %v179, 128
    %197 = vxpose.xlu0.b32.end [16/16] %v181, 128
    %v198 = vpop.trf.xlu0
    %v199 = vpop.trf.xlu0
    %v200 = vpop.trf.xlu0
    %v201 = vpop.trf.xlu0
    %v202 = vpop.trf.xlu0
    %v203 = vpop.trf.xlu0
    %v204 = vpop.trf.xlu0
    %v205 = vpop.trf.xlu0
    %v206 = vpop.trf.xlu0
    %v207 = vpop.trf.xlu0
    %v208 = vpop.trf.xlu0
    %v209 = vpop.trf.xlu0
    %v210 = vpop.trf.xlu0
    %v211 = vpop.trf.xlu0
    %v212 = vpop.trf.xlu0
    %v213 = vpop.trf.xlu0
    %214 = vst [vmem:[%s1] sm:$0xff] %v198
    %215 = vst [vmem:[%s1 + $0x8] sm:$0xff] %v199
    %216 = vst [vmem:[%s1 + $0x10] sm:$0xff] %v200
    %217 = vst [vmem:[%s1 + $0x18] sm:$0xff] %v201
    %218 = vst [vmem:[%s1 + $0x20] sm:$0xff] %v202
    %219 = vst [vmem:[%s1 + $0x28] sm:$0xff] %v203
    %220 = vst [vmem:[%s1 + $0x30] sm:$0xff] %v204
    %221 = vst [vmem:[%s1 + $0x38] sm:$0xff] %v205
    %222 = vst [vmem:[%s1 + $0x40] sm:$0xff] %v206
    %223 = vst [vmem:[%s1 + $0x48] sm:$0xff] %v207
    %224 = vst [vmem:[%s1 + $0x50] sm:$0xff] %v208
    %225 = vst [vmem:[%s1 + $0x58] sm:$0xff] %v209
    %226 = vst [vmem:[%s1 + $0x60] sm:$0xff] %v210
    %227 = vst [vmem:[%s1 + $0x68] sm:$0xff] %v211
    %228 = vst [vmem:[%s1 + $0x70] sm:$0xff] %v212
    %229 = vst [vmem:[%s1 + $0x78] sm:$0xff] %v213
    // Predicated region
    $region10: #{noise_layer.2} parent=1 // pred_check
      _
    $region11: #{noise_layer.2} parent=1 // pred_check_branch
      %231 = sbr.rel (0) target = $region13
    $region12: #{noise_layer.2} parent=1 // pred_region
      _
    $region13: #{noise_layer.2} parent=1 // pred_fallthru
      _
    // Predicated region
    $region14: #{noise_layer.2} parent=1 // pred_check
      _
    $region15: #{noise_layer.2} parent=1 // pred_check_branch
      %233 = sbr.rel (0) target = $region17
    $region16: #{noise_layer.2} parent=1 // pred_region
      _
    $region17: #{noise_layer.2} parent=1 // pred_fallthru
      _
    %234 = vsyncpa [#allocation3], 1

</llo_original>
